<compile_context>
chip_gen: v6e
topology: v6e:2x2x1
jax: 0.10.0
libtpu: 0.0.40
codegen_flags: <defaults>
</compile_context>

<pallas_src>
import jax
import jax.numpy as jnp
from jax.experimental import pallas as pl
from jax.experimental.pallas import tpu as pltpu


def _sigmoid(z):
    # sigmoid(z) == 0.5 * tanh(z/2) + 0.5 : single EUP op, keeps the f32 divide off the VALU.
    return 0.5 * jnp.tanh(0.5 * z) + 0.5


def _mlp_kernel(x_ref, w1_ref, b1_ref, w2_ref, b2_ref, w3_ref, b3_ref, o_ref):
    x = x_ref[...]                                           # [TM, 8]  batch on sublanes
    # Layer 1 on the MXU, contracting the 8 features of each row; the result [6, TM] has the
    # batch on the lane axis, which keeps every later elementwise op / store lane-dense.
    s1 = jax.lax.dot_general(
        w1_ref[...], x, (((1,), (1,)), ((), ())),            # [6,8] . [TM,8]^T -> [6, TM]
        preferred_element_type=jnp.float32)
    h1 = _sigmoid(s1 + b1_ref[...])                          # [6, TM]
    s2 = jnp.dot(w2_ref[...], h1, preferred_element_type=jnp.float32)   # [4, TM]
    h2 = _sigmoid(s2 + b2_ref[...])                          # [4, TM]
    s3 = jnp.dot(w3_ref[...], h2, preferred_element_type=jnp.float32)   # [1, TM]
    o_ref[...] = _sigmoid(s3 + b3_ref[...])                  # [1, TM] lane-dense store


def _round_up(n, m):
    return (n + m - 1) // m * m


def diabetes_logistic_forward(x, params, *, block_n=8192):
    """x: [N, 8] float32.  params: w{1,2,3} as [out, in], b{1,2,3} as [out, 1]."""
    n = x.shape[0]
    assert x.shape[1] == 8
    w1, b1 = params["w1"], params["b1"]
    w2, b2 = params["w2"], params["b2"]
    w3, b3 = params["w3"], params["b3"]

    x = x.astype(jnp.float32)

    # Adaptive batch tile: multiple of 128, big enough to amortize the ~0.35 us per-grid-step
    # overhead, small enough that the lane-padded (TM, 128) x double-buffer stays cheap, and
    # split so large batches get >=2 "parallel" grid steps (v7x megacore).
    cap = max(128, _round_up(block_n, 128))
    n128 = _round_up(n, 128)
    if n128 >= 2048:
        tm = min(cap, _round_up(pl.cdiv(n128, 2), 128))
    else:
        tm = min(cap, n128)

    grid = (pl.cdiv(n, tm),)

    # x double-buffer (lane-padded 16x) + output/weight buffers + temporaries headroom.
    # Only override the scoped-VMEM limit when the v5e 16 MiB default would be too small.
    vmem_est = 2 * (tm * 128 * 4) + 4 * (8 * tm * 4) + (64 << 10)
    vmem_limit = min(int(1.5 * vmem_est), 48 << 20) if vmem_est > (12 << 20) else None

    const = lambda shape: pl.BlockSpec(shape, lambda i: (0, 0))

    out_t = pl.pallas_call(
        _mlp_kernel,
        out_shape=jax.ShapeDtypeStruct((1, n), jnp.float32),
        grid=grid,
        in_specs=[
            pl.BlockSpec((tm, 8), lambda i: (i, 0)),   # x tile, PyTorch-native layout
            const(w1.shape), const(b1.shape),
            const(w2.shape), const(b2.shape),
            const(w3.shape), const(b3.shape),
        ],
        out_specs=pl.BlockSpec((1, tm), lambda i: (0, i)),  # lane-dense output
        compiler_params=pltpu.CompilerParams(
            dimension_semantics=("parallel",),         # shard batch steps across v7x TCs
            vmem_limit_bytes=vmem_limit,
        ),
    )(x, w1, b1, w2, b2, w3, b3)

    # (1, N) -> (N, 1): same contiguous layout, free reshape.
    return out_t.reshape(n, 1)


def init_params(key):
    """Deterministic init matching torch.nn.Linear (weights [out, in], bias [out, 1])."""
    ks = jax.random.split(key, 6)

    def linear(kw, kb, fan_in, fan_out):
        bound = 1.0 / (fan_in ** 0.5)
        w = jax.random.uniform(kw, (fan_out, fan_in), jnp.float32, -bound, bound)
        b = jax.random.uniform(kb, (fan_out, 1), jnp.float32, -bound, bound)
        return w, b

    w1, b1 = linear(ks[0], ks[1], 8, 6)
    w2, b2 = linear(ks[2], ks[3], 6, 4)
    w3, b3 = linear(ks[4], ks[5], 4, 1)
    return {"w1": w1, "b1": b1, "w2": w2, "b2": b2, "w3": w3, "b3": b3}


def _reference(x, p):
    hp = jax.lax.Precision.HIGHEST
    h1 = jax.nn.sigmoid(jnp.dot(x, p["w1"].T, precision=hp) + p["b1"].T)
    h2 = jax.nn.sigmoid(jnp.dot(h1, p["w2"].T, precision=hp) + p["b2"].T)
    return jax.nn.sigmoid(jnp.dot(h2, p["w3"].T, precision=hp) + p["b3"].T)


if __name__ == "__main__":
    key = jax.random.PRNGKey(0)
    kx, kp = jax.random.split(key)
    params = init_params(kp)

    # Case 1: small batch, not a multiple of 128 (single ragged block, masked tail).
    x1 = jax.random.normal(kx, (200, 8), jnp.float32)
    out1 = jax.block_until_ready(diabetes_logistic_forward(x1, params))
    ref1 = _reference(x1, params)
    assert out1.shape == (200, 1)
    assert jnp.allclose(out1, ref1, atol=1e-5, rtol=1e-5), "mismatch vs reference (batch=200)"

    # Case 2: small explicit tile -> 3 pipelined grid steps (last one ragged).
    x2 = jax.random.normal(jax.random.fold_in(kx, 1), (640, 8), jnp.float32)
    out2 = jax.block_until_ready(diabetes_logistic_forward(x2, params, block_n=256))
    ref2 = _reference(x2, params)
    assert out2.shape == (640, 1)
    assert jnp.allclose(out2, ref2, atol=1e-5, rtol=1e-5), "mismatch vs reference (batch=640)"

    # Case 3: default tiling on a larger batch -> adaptive split into >=2 "parallel" steps.
    x3 = jax.random.normal(jax.random.fold_in(kx, 2), (3000, 8), jnp.float32)
    out3 = jax.block_until_ready(diabetes_logistic_forward(x3, params))
    ref3 = _reference(x3, params)
    assert out3.shape == (3000, 1)
    assert jnp.allclose(out3, ref3, atol=1e-5, rtol=1e-5), "mismatch vs reference (batch=3000)"

    print("KERNEL_OK")
</pallas_src>

<mosaic_0001>
module attributes {stable_mosaic.version = 11 : i64} {
  func.func @_mlp_kernel(%arg0: i32, %arg1: memref<256x8xf32, #tpu.memory_space<vmem>>, %arg2: memref<6x8xf32, #tpu.memory_space<vmem>>, %arg3: memref<6x1xf32, #tpu.memory_space<vmem>>, %arg4: memref<4x6xf32, #tpu.memory_space<vmem>>, %arg5: memref<4x1xf32, #tpu.memory_space<vmem>>, %arg6: memref<1x4xf32, #tpu.memory_space<vmem>>, %arg7: memref<1x1xf32, #tpu.memory_space<vmem>>, %arg8: memref<1x256xf32, #tpu.memory_space<vmem>>) attributes {dimension_semantics = [#tpu.dimension_semantics<parallel>], iteration_bounds = array<i64: 1>, scalar_prefetch = 0 : i64, scratch_operands = 0 : i64, tpu.core_type = #tpu.core_type<tc>, window_params = [{transform_indices = @transform_0, window_bounds = array<i64: 256, 8>}, {pipeline_mode = #tpu.pipeline_mode<synchronous>, transform_indices = @transform_1, window_bounds = array<i64: 6, 8>}, {pipeline_mode = #tpu.pipeline_mode<synchronous>, transform_indices = @transform_2, window_bounds = array<i64: 6, 1>}, {pipeline_mode = #tpu.pipeline_mode<synchronous>, transform_indices = @transform_3, window_bounds = array<i64: 4, 6>}, {pipeline_mode = #tpu.pipeline_mode<synchronous>, transform_indices = @transform_4, window_bounds = array<i64: 4, 1>}, {pipeline_mode = #tpu.pipeline_mode<synchronous>, transform_indices = @transform_5, window_bounds = array<i64: 1, 4>}, {pipeline_mode = #tpu.pipeline_mode<synchronous>, transform_indices = @transform_6, window_bounds = array<i64: 1, 1>}, {transform_indices = @transform_7, window_bounds = array<i64: 1, 256>}]} {
    %c0 = arith.constant 0 : index
    %c0_0 = arith.constant 0 : index
    %0 = vector.load %arg1[%c0, %c0_0] : memref<256x8xf32, #tpu.memory_space<vmem>>, vector<256x8xf32>
    %c0_1 = arith.constant 0 : index
    %c0_2 = arith.constant 0 : index
    %1 = vector.load %arg2[%c0_1, %c0_2] : memref<6x8xf32, #tpu.memory_space<vmem>>, vector<6x8xf32>
    %cst = arith.constant dense<0.000000e+00> : vector<6x256xf32>
    %2 = tpu.matmul %1, %0, %cst {dimension_numbers = #tpu.dot_dimension_numbers<[1], [1], [0], [0], [0, 0, 1, 0], [], []>} : vector<6x8xf32>, vector<256x8xf32>, vector<6x256xf32> -> vector<6x256xf32>
    %c0_3 = arith.constant 0 : index
    %c0_4 = arith.constant 0 : index
    %3 = vector.load %arg3[%c0_3, %c0_4] : memref<6x1xf32, #tpu.memory_space<vmem>>, vector<6x1xf32>
    %4 = vector.broadcast %3 : vector<6x1xf32> to vector<6x256xf32>
    %5 = arith.addf %2, %4 : vector<6x256xf32>
    %cst_5 = arith.constant 5.000000e-01 : f32
    %6 = vector.broadcast %cst_5 : f32 to vector<6x256xf32>
    %7 = arith.mulf %6, %5 : vector<6x256xf32>
    %8 = math.tanh %7 : vector<6x256xf32>
    %cst_6 = arith.constant 5.000000e-01 : f32
    %9 = vector.broadcast %cst_6 : f32 to vector<6x256xf32>
    %10 = arith.mulf %9, %8 : vector<6x256xf32>
    %cst_7 = arith.constant 5.000000e-01 : f32
    %11 = vector.broadcast %cst_7 : f32 to vector<6x256xf32>
    %12 = arith.addf %10, %11 : vector<6x256xf32>
    %c0_8 = arith.constant 0 : index
    %c0_9 = arith.constant 0 : index
    %13 = vector.load %arg4[%c0_8, %c0_9] : memref<4x6xf32, #tpu.memory_space<vmem>>, vector<4x6xf32>
    %cst_10 = arith.constant dense<0.000000e+00> : vector<4x256xf32>
    %14 = tpu.matmul %13, %12, %cst_10 {dimension_numbers = #tpu.dot_dimension_numbers<[1], [0], [0], [1], [0, 0, 1, 1], [], []>} : vector<4x6xf32>, vector<6x256xf32>, vector<4x256xf32> -> vector<4x256xf32>
    %c0_11 = arith.constant 0 : index
    %c0_12 = arith.constant 0 : index
    %15 = vector.load %arg5[%c0_11, %c0_12] : memref<4x1xf32, #tpu.memory_space<vmem>>, vector<4x1xf32>
    %16 = vector.broadcast %15 : vector<4x1xf32> to vector<4x256xf32>
    %17 = arith.addf %14, %16 : vector<4x256xf32>
    %cst_13 = arith.constant 5.000000e-01 : f32
    %18 = vector.broadcast %cst_13 : f32 to vector<4x256xf32>
    %19 = arith.mulf %18, %17 : vector<4x256xf32>
    %20 = math.tanh %19 : vector<4x256xf32>
    %cst_14 = arith.constant 5.000000e-01 : f32
    %21 = vector.broadcast %cst_14 : f32 to vector<4x256xf32>
    %22 = arith.mulf %21, %20 : vector<4x256xf32>
    %cst_15 = arith.constant 5.000000e-01 : f32
    %23 = vector.broadcast %cst_15 : f32 to vector<4x256xf32>
    %24 = arith.addf %22, %23 : vector<4x256xf32>
    %c0_16 = arith.constant 0 : index
    %c0_17 = arith.constant 0 : index
    %25 = vector.load %arg6[%c0_16, %c0_17] : memref<1x4xf32, #tpu.memory_space<vmem>>, vector<1x4xf32>
    %cst_18 = arith.constant dense<0.000000e+00> : vector<1x256xf32>
    %26 = tpu.matmul %25, %24, %cst_18 {dimension_numbers = #tpu.dot_dimension_numbers<[1], [0], [0], [1], [0, 0, 1, 1], [], []>} : vector<1x4xf32>, vector<4x256xf32>, vector<1x256xf32> -> vector<1x256xf32>
    %c0_19 = arith.constant 0 : index
    %c0_20 = arith.constant 0 : index
    %27 = vector.load %arg7[%c0_19, %c0_20] : memref<1x1xf32, #tpu.memory_space<vmem>>, vector<1x1xf32>
    %28 = vector.broadcast %27 : vector<1x1xf32> to vector<1x256xf32>
    %29 = arith.addf %26, %28 : vector<1x256xf32>
    %cst_21 = arith.constant 5.000000e-01 : f32
    %30 = vector.broadcast %cst_21 : f32 to vector<1x256xf32>
    %31 = arith.mulf %30, %29 : vector<1x256xf32>
    %32 = math.tanh %31 : vector<1x256xf32>
    %cst_22 = arith.constant 5.000000e-01 : f32
    %33 = vector.broadcast %cst_22 : f32 to vector<1x256xf32>
    %34 = arith.mulf %33, %32 : vector<1x256xf32>
    %cst_23 = arith.constant 5.000000e-01 : f32
    %35 = vector.broadcast %cst_23 : f32 to vector<1x256xf32>
    %36 = arith.addf %34, %35 : vector<1x256xf32>
    %c0_24 = arith.constant 0 : index
    %c0_25 = arith.constant 0 : index
    %37 = vector.load %arg8[%c0_24, %c0_25] : memref<1x256xf32, #tpu.memory_space<vmem>>, vector<1x256xf32>
    tpu.vector_store %arg8[%c0_24, %c0_25], %36 {strides = array<i32>} : memref<1x256xf32, #tpu.memory_space<vmem>>, vector<1x256xf32>,
    return
  }
  func.func @transform_0(%arg0: i32) -> (i32, i32) {
    %c0_i32 = arith.constant 0 : i32
    %c0_i32_0 = arith.constant 0 : i32
    return %arg0, %c0_i32 : i32, i32
  }
  func.func @transform_1(%arg0: i32) -> (i32, i32) {
    %c0_i32 = arith.constant 0 : i32
    %c0_i32_0 = arith.constant 0 : i32
    %c0_i32_1 = arith.constant 0 : i32
    return %c0_i32, %c0_i32_0 : i32, i32
  }
  func.func @transform_2(%arg0: i32) -> (i32, i32) {
    %c0_i32 = arith.constant 0 : i32
    %c0_i32_0 = arith.constant 0 : i32
    %c0_i32_1 = arith.constant 0 : i32
    return %c0_i32, %c0_i32_0 : i32, i32
  }
  func.func @transform_3(%arg0: i32) -> (i32, i32) {
    %c0_i32 = arith.constant 0 : i32
    %c0_i32_0 = arith.constant 0 : i32
    %c0_i32_1 = arith.constant 0 : i32
    return %c0_i32, %c0_i32_0 : i32, i32
  }
  func.func @transform_4(%arg0: i32) -> (i32, i32) {
    %c0_i32 = arith.constant 0 : i32
    %c0_i32_0 = arith.constant 0 : i32
    %c0_i32_1 = arith.constant 0 : i32
    return %c0_i32, %c0_i32_0 : i32, i32
  }
  func.func @transform_5(%arg0: i32) -> (i32, i32) {
    %c0_i32 = arith.constant 0 : i32
    %c0_i32_0 = arith.constant 0 : i32
    %c0_i32_1 = arith.constant 0 : i32
    return %c0_i32, %c0_i32_0 : i32, i32
  }
  func.func @transform_6(%arg0: i32) -> (i32, i32) {
    %c0_i32 = arith.constant 0 : i32
    %c0_i32_0 = arith.constant 0 : i32
    %c0_i32_1 = arith.constant 0 : i32
    return %c0_i32, %c0_i32_0 : i32, i32
  }
  func.func @transform_7(%arg0: i32) -> (i32, i32) {
    %c0_i32 = arith.constant 0 : i32
    %c0_i32_0 = arith.constant 0 : i32
    return %c0_i32, %arg0 : i32, i32
  }
}

</mosaic_0001>

<llo_original>
// kernel: tpu_custom_call.1
$region0: #{tpu_custom_call.1}
  #allocation0 [shape = 'u32[]', space=smem, size = 0x4, offset = 0x4, fixed_abs, tag = 'smem constant byte address 0x4 - core index']
  #allocation1 [shape = 'u32[144,128]{1,0:T(1,128)}', space=vmem, size = 0x12000, scoped, tag = 'internal scratch']
  #allocation2 [shape = 'f32[1,1]{1,0:T(1,128)S(1)}', space=vmem, size = 0x200, scoped, tag = 'scoped memory for tpu_custom_call.1']
  %s0 = inlined_call_operand.vmem [shape: f32[200,8], index: 0, kind: input, shape index: {}]
  %s1 = inlined_call_operand.vmem [shape: f32[6,8], index: 1, kind: input, shape index: {}]
  %s2 = inlined_call_operand.vmem [shape: f32[6,1], index: 2, kind: input, shape index: {}]
  %s3 = inlined_call_operand.vmem [shape: f32[4,6], index: 3, kind: input, shape index: {}]
  %s4 = inlined_call_operand.vmem [shape: f32[4,1], index: 4, kind: input, shape index: {}]
  %s5 = inlined_call_operand.vmem [shape: f32[1,4], index: 5, kind: input, shape index: {}]
  %s6 = inlined_call_operand.<no memory space> [shape: f32[1,1], index: 6, kind: input, shape index: {}]
  %s7 = inlined_call_operand.hbm [shape: f32[1,200], index: 7, kind: output, shape index: {}]
  %s8 = sld [smem:[#allocation0]]
  $region38: #{tpu_custom_call.1} parent=0
    _
  %s10 = ssub.s32 1, %s8
  %s11 = scalar_select 0, %s10, %s8
  %v12 = vstv %s6
  %13 = vst [vmem:[#allocation2] sm:$0x1] %v12
  $region1: #{tpu_custom_call.1} parent=0
    #allocation3 [shape = 'u8[1024]{0}', space=vmem, size = 0x400, scoped, tag = 'output window, operand 0, single buffered']
    #allocation4 [shape = 's32[1]{0}', space=sflag, size = 0x4, scoped, tag = 'scoped memory for tpu_custom_call.1']
    %14 = vsyncpa [#allocation4], 0
    // Predicated region
    $region2: #{tpu_custom_call.1} parent=1 // pred_check
      _
    $region3: #{tpu_custom_call.1} parent=1 // pred_check_branch
      %16 = sbr.rel (0) target = $region5
    $region4: #{tpu_custom_call.1} parent=1 // pred_region
      _
    $region5: #{tpu_custom_call.1} parent=1 // pred_fallthru
      _
    // Predicated region
    $region6: #{tpu_custom_call.1} parent=1 // pred_check
      _
    $region7: #{tpu_custom_call.1} parent=1 // pred_check_branch
      %18 = sbr.rel (0) target = $region9
    $region8: #{tpu_custom_call.1} parent=1 // pred_region
      _
    $region9: #{tpu_custom_call.1} parent=1 // pred_fallthru
      _
    // Predicated region
    $region10: #{tpu_custom_call.1} parent=1 // pred_check
      _
    $region11: #{tpu_custom_call.1} parent=1 // pred_check_branch
      %20 = sbr.rel (0) target = $region13
    $region12: #{tpu_custom_call.1} parent=1 // pred_region
      _
    $region13: #{tpu_custom_call.1} parent=1 // pred_fallthru
      _
    // Predicated region
    $region14: #{tpu_custom_call.1} parent=1 // pred_check
      _
    $region15: #{tpu_custom_call.1} parent=1 // pred_check_branch
      %22 = sbr.rel (0) target = $region17
    $region16: #{tpu_custom_call.1} parent=1 // pred_region
      _
    $region17: #{tpu_custom_call.1} parent=1 // pred_fallthru
      _
    // Predicated region
    $region18: #{tpu_custom_call.1} parent=1 // pred_check
      _
    $region19: #{tpu_custom_call.1} parent=1 // pred_check_branch
      %24 = sbr.rel (0) target = $region21
    $region20: #{tpu_custom_call.1} parent=1 // pred_region
      _
    $region21: #{tpu_custom_call.1} parent=1 // pred_fallthru
      _
    // Predicated region
    $region22: #{tpu_custom_call.1} parent=1 // pred_check
      _
    $region23: #{tpu_custom_call.1} parent=1 // pred_check_branch
      %26 = sbr.rel (0) target = $region25
    $region24: #{tpu_custom_call.1} parent=1 // pred_region
      _
    $region25: #{tpu_custom_call.1} parent=1 // pred_fallthru
      _
    // Predicated region
    $region26: #{tpu_custom_call.1} parent=1 // pred_check
      _
    $region27: #{tpu_custom_call.1} parent=1 // pred_check_branch
      %28 = sbr.rel (0) target = $region29
    $region28: #{tpu_custom_call.1} parent=1 // pred_region
      _
    $region29: #{tpu_custom_call.1} parent=1 // pred_fallthru
      _
    %v29 = vld [vmem:[%s0] sm:$0xff]
    %v30 = vld [vmem:[%s0 + $0x8] sm:$0xff]
    %v31 = vld [vmem:[%s0 + $0x10] sm:$0xff]
    %v32 = vld [vmem:[%s0 + $0x18] sm:$0xff]
    %v33 = vld [vmem:[%s0 + $0x20] sm:$0xff]
    %v34 = vld [vmem:[%s0 + $0x28] sm:$0xff]
    %v35 = vld [vmem:[%s0 + $0x30] sm:$0xff]
    %v36 = vld [vmem:[%s0 + $0x38] sm:$0xff]
    %v37 = vld [vmem:[%s0 + $0x40] sm:$0xff]
    %v38 = vld [vmem:[%s0 + $0x48] sm:$0xff]
    %v39 = vld [vmem:[%s0 + $0x50] sm:$0xff]
    %v40 = vld [vmem:[%s0 + $0x58] sm:$0xff]
    %v41 = vld [vmem:[%s0 + $0x60] sm:$0xff]
    %v42 = vld [vmem:[%s0 + $0x68] sm:$0xff]
    %v43 = vld [vmem:[%s0 + $0x70] sm:$0xff]
    %v44 = vld [vmem:[%s0 + $0x78] sm:$0xff]
    %v45 = vld [vmem:[%s0 + $0x80] sm:$0xff]
    %v46 = vld [vmem:[%s0 + $0x88] sm:$0xff]
    %v47 = vld [vmem:[%s0 + $0x90] sm:$0xff]
    %v48 = vld [vmem:[%s0 + $0x98] sm:$0xff]
    %v49 = vld [vmem:[%s0 + $0xa0] sm:$0xff]
    %v50 = vld [vmem:[%s0 + $0xa8] sm:$0xff]
    %v51 = vld [vmem:[%s0 + $0xb0] sm:$0xff]
    %v52 = vld [vmem:[%s0 + $0xb8] sm:$0xff]
    %v53 = vld [vmem:[%s0 + $0xc0] sm:$0xff]
    %v54 = vld [vmem:[%s0 + $0xc8] sm:$0xff]
    %v55 = vld [vmem:[%s0 + $0xd0] sm:$0xff]
    %v56 = vld [vmem:[%s0 + $0xd8] sm:$0xff]
    %v57 = vld [vmem:[%s0 + $0xe0] sm:$0xff]
    %v58 = vld [vmem:[%s0 + $0xe8] sm:$0xff]
    %v59 = vld [vmem:[%s0 + $0xf0] sm:$0xff]
    %v60 = vld [vmem:[%s0 + $0xf8] sm:$0xff]
    %v61 = vld [vmem:[%s1] sm:$0x3f]
    %v62 = vld [vmem:[%s2] sm:$0x3f]
    %64 = vset.pattern.permute.xlu0 0
    %65 = vperm.xlu0 %64, %v62
    %v66 = vpop.permute.xlu0 %65
    %vm68 = vcmask 64512
    %v70 = vsel %vm68, %v61, 0
    %v73 = vsel %vm68, %v29, 0
    %v76 = vsel %vm68, %v30, 0
    %v79 = vsel %vm68, %v31, 0
    %v82 = vsel %vm68, %v32, 0
    %v85 = vsel %vm68, %v33, 0
    %v88 = vsel %vm68, %v34, 0
    %v91 = vsel %vm68, %v35, 0
    %v94 = vsel %vm68, %v36, 0
    %v97 = vsel %vm68, %v37, 0
    %v100 = vsel %vm68, %v38, 0
    %v103 = vsel %vm68, %v39, 0
    %v106 = vsel %vm68, %v40, 0
    %v109 = vsel %vm68, %v41, 0
    %v112 = vsel %vm68, %v42, 0
    %v115 = vsel %vm68, %v43, 0
    %v118 = vsel %vm68, %v44, 0
    %v121 = vsel %vm68, %v45, 0
    %v124 = vsel %vm68, %v46, 0
    %v127 = vsel %vm68, %v47, 0
    %v130 = vsel %vm68, %v48, 0
    %v133 = vsel %vm68, %v49, 0
    %v136 = vsel %vm68, %v50, 0
    %v139 = vsel %vm68, %v51, 0
    %v142 = vsel %vm68, %v52, 0
    %v145 = vsel %vm68, %v53, 0
    %v148 = vsel %vm68, %v54, 0
    %v151 = vsel %vm68, %v55, 0
    %v154 = vsel %vm68, %v56, 0
    %v157 = vsel %vm68, %v57, 0
    %v160 = vsel %vm68, %v58, 0
    %v163 = vsel %vm68, %v59, 0
    %v166 = vsel %vm68, %v60, 0
    %168 = vmatprep.subr.mxu0 0.0
    %169 = vmatpush1.xpose.msra.mxu0 %v118
    %170 = vmatprep.subr.mxu0 0.0
    %171 = vmatpush1.xpose.msra.mxu0 %v115
    %172 = vmatprep.subr.mxu0 0.0
    %173 = vmatpush1.xpose.msra.mxu0 %v112
    %174 = vmatprep.subr.mxu0 0.0
    %175 = vmatpush1.xpose.msra.mxu0 %v109
    %176 = vmatprep.subr.mxu0 0.0
    %177 = vmatpush1.xpose.msra.mxu0 %v106
    %178 = vmatprep.subr.mxu0 0.0
    %179 = vmatpush1.xpose.msra.mxu0 %v103
    %180 = vmatprep.subr.mxu0 0.0
    %181 = vmatpush1.xpose.msra.mxu0 %v100
    %182 = vmatprep.subr.mxu0 0.0
    %183 = vmatpush1.xpose.msra.mxu0 %v97
    %184 = vmatprep.subr.mxu0 0.0
    %185 = vmatpush1.xpose.msra.mxu0 %v94
    %186 = vmatprep.subr.mxu0 0.0
    %187 = vmatpush1.xpose.msra.mxu0 %v91
    %188 = vmatprep.subr.mxu0 0.0
    %189 = vmatpush1.xpose.msra.mxu0 %v88
    %190 = vmatprep.subr.mxu0 0.0
    %191 = vmatpush1.xpose.msra.mxu0 %v85
    %192 = vmatprep.subr.mxu0 0.0
    %193 = vmatpush1.xpose.msra.mxu0 %v82
    %194 = vmatprep.subr.mxu0 0.0
    %195 = vmatpush1.xpose.msra.mxu0 %v79
    %196 = vmatprep.subr.mxu0 0.0
    %197 = vmatpush1.xpose.msra.mxu0 %v76
    %198 = vmatprep.subr.mxu0 0.0
    %199 = vmatpush1.xpose.msra.mxu0 %v73
    %200 = vmatprep.subr.mxu0 0.0
    %201 = vmatpush2.xpose.msra.mxu0 %v166
    %202 = vmatprep.subr.mxu0 0.0
    %203 = vmatpush2.xpose.msra.mxu0 %v163
    %204 = vmatprep.subr.mxu0 0.0
    %205 = vmatpush2.xpose.msra.mxu0 %v160
    %206 = vmatprep.subr.mxu0 0.0
    %207 = vmatpush2.xpose.msra.mxu0 %v157
    %208 = vmatprep.subr.mxu0 0.0
    %209 = vmatpush2.xpose.msra.mxu0 %v154
    %210 = vmatprep.subr.mxu0 0.0
    %211 = vmatpush2.xpose.msra.mxu0 %v151
    %212 = vmatprep.subr.mxu0 0.0
    %213 = vmatpush2.xpose.msra.mxu0 %v148
    %214 = vmatprep.subr.mxu0 0.0
    %215 = vmatpush2.xpose.msra.mxu0 %v145
    %216 = vmatprep.subr.mxu0 0.0
    %217 = vmatpush2.xpose.msra.mxu0 %v142
    %218 = vmatprep.subr.mxu0 0.0
    %219 = vmatpush2.xpose.msra.mxu0 %v139
    %220 = vmatprep.subr.mxu0 0.0
    %221 = vmatpush2.xpose.msra.mxu0 %v136
    %222 = vmatprep.subr.mxu0 0.0
    %223 = vmatpush2.xpose.msra.mxu0 %v133
    %224 = vmatprep.subr.mxu0 0.0
    %225 = vmatpush2.xpose.msra.mxu0 %v130
    %226 = vmatprep.subr.mxu0 0.0
    %227 = vmatpush2.xpose.msra.mxu0 %v127
    %228 = vmatprep.subr.mxu0 0.0
    %229 = vmatpush2.xpose.msra.mxu0 %v124
    %230 = vmatprep.subr.mxu0 0.0
    %231 = vmatpush2.xpose.msra.mxu0 %v121
    %232 = vmatprep.mubr.f32.mxu0 0.0
    %233 = vmatmul.mubr.f32.gmra.mxu0 %v70
    %v234 = vpop.f32.mrf.mxu0
    %v235 = vadd.f32 %v66, %v234
    %v236 = vpop.f32.mrf.mxu0
    %v237 = vadd.f32 %v66, %v236
    %238 = vdwg.mxu0
    %v239 = vmul.f32 %v235, 0.5
    %v240 = vmul.f32 %v237, 0.5
    %v241 = vtanh.pop %v239
    %v242 = vtanh.pop %v240
    %v243 = vmul.f32 %v241, 0.5
    %v244 = vmul.f32 %v242, 0.5
    %v245 = vadd.f32 %v243, 0.5
    %v246 = vadd.f32 %v244, 0.5
    %v247 = vld [vmem:[%s3] sm:$0xf]
    %v248 = vld [vmem:[%s4] sm:$0xf]
    %250 = vset.pattern.permute.xlu0 0
    %251 = vperm.xlu0 %250, %v248
    %v252 = vpop.permute.xlu0 %251
    %vm254 = vcmask 48128
    %v256 = vsel %vm254, %v247, 0
    %vm258 = vcmask 1045504
    %v260 = vsel %vm258, %v245, 0
    %v263 = vsel %vm258, %v246, 0
    %265 = vmatprep.subr.mxu0 0.0
    %266 = vmatpush1.msra.mxu0 0.0
    %267 = vmatprep.subr.mxu0 0.0
    %268 = vmatpush1.msra.mxu0 0.0
    %269 = vmatprep.subr.mxu0 0.0
    %270 = vmatpush1.msra.mxu0 0.0
    %271 = vmatprep.subr.mxu0 0.0
    %272 = vmatpush1.msra.mxu0 0.0
    %273 = vmatprep.subr.mxu0 0.0
    %274 = vmatpush1.msra.mxu0 0.0
    %275 = vmatprep.subr.mxu0 0.0
    %276 = vmatpush1.msra.mxu0 0.0
    %277 = vmatprep.subr.mxu0 0.0
    %278 = vmatpush1.msra.mxu0 0.0
    %279 = vmatprep.subr.mxu0 0.0
    %280 = vmatpush1.msra.mxu0 0.0
    %281 = vmatprep.subr.mxu0 0.0
    %282 = vmatpush1.msra.mxu0 0.0
    %283 = vmatprep.subr.mxu0 0.0
    %284 = vmatpush1.msra.mxu0 0.0
    %285 = vmatprep.subr.mxu0 0.0
    %286 = vmatpush1.msra.mxu0 0.0
    %287 = vmatprep.subr.mxu0 0.0
    %288 = vmatpush1.msra.mxu0 0.0
    %289 = vmatprep.subr.mxu0 0.0
    %290 = vmatpush1.msra.mxu0 0.0
    %291 = vmatprep.subr.mxu0 0.0
    %292 = vmatpush1.msra.mxu0 0.0
    %293 = vmatprep.subr.mxu0 0.0
    %294 = vmatpush1.msra.mxu0 0.0
    %295 = vmatprep.subr.mxu0 %v263
    %296 = vmatpush1.msra.mxu0 %v260
    %297 = vmatprep.subr.mxu0 0.0
    %298 = vmatpush2.msra.mxu0 0.0
    %299 = vmatprep.subr.mxu0 0.0
    %300 = vmatpush2.msra.mxu0 0.0
    %301 = vmatprep.subr.mxu0 0.0
    %302 = vmatpush2.msra.mxu0 0.0
    %303 = vmatprep.subr.mxu0 0.0
    %304 = vmatpush2.msra.mxu0 0.0
    %305 = vmatprep.subr.mxu0 0.0
    %306 = vmatpush2.msra.mxu0 0.0
    %307 = vmatprep.subr.mxu0 0.0
    %308 = vmatpush2.msra.mxu0 0.0
    %309 = vmatprep.subr.mxu0 0.0
    %310 = vmatpush2.msra.mxu0 0.0
    %311 = vmatprep.subr.mxu0 0.0
    %312 = vmatpush2.msra.mxu0 0.0
    %313 = vmatprep.subr.mxu0 0.0
    %314 = vmatpush2.msra.mxu0 0.0
    %315 = vmatprep.subr.mxu0 0.0
    %316 = vmatpush2.msra.mxu0 0.0
    %317 = vmatprep.subr.mxu0 0.0
    %318 = vmatpush2.msra.mxu0 0.0
    %319 = vmatprep.subr.mxu0 0.0
    %320 = vmatpush2.msra.mxu0 0.0
    %321 = vmatprep.subr.mxu0 0.0
    %322 = vmatpush2.msra.mxu0 0.0
    %323 = vmatprep.subr.mxu0 0.0
    %324 = vmatpush2.msra.mxu0 0.0
    %325 = vmatprep.subr.mxu0 0.0
    %326 = vmatpush2.msra.mxu0 0.0
    %327 = vmatprep.subr.mxu0 0.0
    %328 = vmatpush2.msra.mxu0 0.0
    %329 = vmatprep.mubr.f32.mxu0 0.0
    %330 = vmatmul.mubr.f32.gmra.mxu0 %v256
    %v331 = vpop.f32.mrf.mxu0
    %v332 = vadd.f32 %v252, %v331
    %v333 = vpop.f32.mrf.mxu0
    %v334 = vadd.f32 %v252, %v333
    %335 = vdwg.mxu0
    %v336 = vmul.f32 %v332, 0.5
    %v337 = vmul.f32 %v334, 0.5
    %v338 = vtanh.pop %v336
    %v339 = vtanh.pop %v337
    %v340 = vmul.f32 %v338, 0.5
    %v341 = vmul.f32 %v339, 0.5
    %v342 = vadd.f32 %v340, 0.5
    %v343 = vadd.f32 %v341, 0.5
    %v344 = vld [vmem:[%s5] sm:$0x1]
    %v345 = vld [vmem:[#allocation2] sm:$0x1]
    %347 = vset.pattern.permute.xlu0 0
    %348 = vperm.xlu0 %347, %v345
    %v349 = vpop.permute.xlu0 %348
    %v351 = vlaneseq
    %v352 = vshrl.u32 %v351, 7
    %v353 = vsub.s32 0, %v352
    %v354 = vrot.slane %v349, %v353
    %vm355 = vcmask 31744
    %v357 = vsel %vm355, %v344, 0
    %vm359 = vcmask 1043456
    %v361 = vsel %vm359, %v342, 0
    %v364 = vsel %vm359, %v343, 0
    %366 = vmatprep.subr.mxu0 0.0
    %367 = vmatpush1.msra.mxu0 0.0
    %368 = vmatprep.subr.mxu0 0.0
    %369 = vmatpush1.msra.mxu0 0.0
    %370 = vmatprep.subr.mxu0 0.0
    %371 = vmatpush1.msra.mxu0 0.0
    %372 = vmatprep.subr.mxu0 0.0
    %373 = vmatpush1.msra.mxu0 0.0
    %374 = vmatprep.subr.mxu0 0.0
    %375 = vmatpush1.msra.mxu0 0.0
    %376 = vmatprep.subr.mxu0 0.0
    %377 = vmatpush1.msra.mxu0 0.0
    %378 = vmatprep.subr.mxu0 0.0
    %379 = vmatpush1.msra.mxu0 0.0
    %380 = vmatprep.subr.mxu0 0.0
    %381 = vmatpush1.msra.mxu0 0.0
    %382 = vmatprep.subr.mxu0 0.0
    %383 = vmatpush1.msra.mxu0 0.0
    %384 = vmatprep.subr.mxu0 0.0
    %385 = vmatpush1.msra.mxu0 0.0
    %386 = vmatprep.subr.mxu0 0.0
    %387 = vmatpush1.msra.mxu0 0.0
    %388 = vmatprep.subr.mxu0 0.0
    %389 = vmatpush1.msra.mxu0 0.0
    %390 = vmatprep.subr.mxu0 0.0
    %391 = vmatpush1.msra.mxu0 0.0
    %392 = vmatprep.subr.mxu0 0.0
    %393 = vmatpush1.msra.mxu0 0.0
    %394 = vmatprep.subr.mxu0 0.0
    %395 = vmatpush1.msra.mxu0 0.0
    %396 = vmatprep.subr.mxu0 %v364
    %397 = vmatpush1.msra.mxu0 %v361
    %398 = vmatprep.subr.mxu0 0.0
    %399 = vmatpush2.msra.mxu0 0.0
    %400 = vmatprep.subr.mxu0 0.0
    %401 = vmatpush2.msra.mxu0 0.0
    %402 = vmatprep.subr.mxu0 0.0
    %403 = vmatpush2.msra.mxu0 0.0
    %404 = vmatprep.subr.mxu0 0.0
    %405 = vmatpush2.msra.mxu0 0.0
    %406 = vmatprep.subr.mxu0 0.0
    %407 = vmatpush2.msra.mxu0 0.0
    %408 = vmatprep.subr.mxu0 0.0
    %409 = vmatpush2.msra.mxu0 0.0
    %410 = vmatprep.subr.mxu0 0.0
    %411 = vmatpush2.msra.mxu0 0.0
    %412 = vmatprep.subr.mxu0 0.0
    %413 = vmatpush2.msra.mxu0 0.0
    %414 = vmatprep.subr.mxu0 0.0
    %415 = vmatpush2.msra.mxu0 0.0
    %416 = vmatprep.subr.mxu0 0.0
    %417 = vmatpush2.msra.mxu0 0.0
    %418 = vmatprep.subr.mxu0 0.0
    %419 = vmatpush2.msra.mxu0 0.0
    %420 = vmatprep.subr.mxu0 0.0
    %421 = vmatpush2.msra.mxu0 0.0
    %422 = vmatprep.subr.mxu0 0.0
    %423 = vmatpush2.msra.mxu0 0.0
    %424 = vmatprep.subr.mxu0 0.0
    %425 = vmatpush2.msra.mxu0 0.0
    %426 = vmatprep.subr.mxu0 0.0
    %427 = vmatpush2.msra.mxu0 0.0
    %428 = vmatprep.subr.mxu0 0.0
    %429 = vmatpush2.msra.mxu0 0.0
    %430 = vmatprep.mubr.f32.mxu0 0.0
    %431 = vmatmul.mubr.f32.gmra.mxu0 %v357
    %v432 = vpop.f32.mrf.mxu0
    %v433 = vadd.f32 %v354, %v432
    %v434 = vpop.f32.mrf.mxu0
    %v435 = vadd.f32 %v354, %v434
    %436 = vdwg.mxu0
    %v437 = vmul.f32 %v433, 0.5
    %v438 = vmul.f32 %v435, 0.5
    %v439 = vtanh.pop %v437
    %v440 = vtanh.pop %v438
    %v441 = vmul.f32 %v439, 0.5
    %v442 = vmul.f32 %v440, 0.5
    %v443 = vadd.f32 %v441, 0.5
    %v444 = vadd.f32 %v442, 0.5
    %v447 = vcombine.low %v443, %v444
    %v449 = vunpack.c.l.s4 1966171168
    %v450 = vunpack.c.0.s8 %v449
    %v451 = vlaneseq
    %v452 = vshrl.u32 %v451, 7
    %v453 = vsub.s32 %v450, %v452
    %v454 = vrot.slane %v447, %v453
    %v456 = vunpack.c.l.s4 1966171168
    %v457 = vunpack.c.0.s8 %v456
    %v458 = vlaneseq
    %v459 = vshrl.u32 %v458, 7
    %v460 = vsub.s32 %v457, %v459
    %v461 = vrot.slane %v454, %v460
    %v463 = vlaneseq
    %vm464 = vcmp.ge.s32.totalorder %v463, 0
    %vm465 = vcmp.lt.s32.totalorder %v463, 256
    %vm466 = vmand %vm464, %vm465
    %467 = vst.msk [vmem:[#allocation3] sm:$0x3] %vm466, %v461
    // Predicated region
    $region30: #{tpu_custom_call.1} parent=1 // pred_check
      _
    $region31: #{tpu_custom_call.1} parent=1 // pred_check_branch
      %469 = sbr.rel (0) target = $region33
    $region32: #{tpu_custom_call.1} parent=1 // pred_region
      %s471 = ssub.s32 32, 32
      %472 = vsyncadd [#allocation4], %s471
      %s474 = sshll.u32 [#allocation3], 4
      %s475 = int_to_ptr.vmem [resolvable:$true] %s474
      %477 = dma.vmem_to_hbm [thread:$0]  %s475, 32, %s7, [#allocation4]
    $region33: #{tpu_custom_call.1} parent=1 // pred_fallthru
      _
    // Predicated region
    $region34: #{tpu_custom_call.1} parent=1 // pred_check
      _
    $region35: #{tpu_custom_call.1} parent=1 // pred_check_branch
      %479 = sbr.rel (0) target = $region37
    $region36: #{tpu_custom_call.1} parent=1 // pred_region
      %480 = dma.done [#allocation4], 32
    $region37: #{tpu_custom_call.1} parent=1 // pred_fallthru
      _
    %481 = vsyncpa [#allocation4], 1

</llo_original>
